<compile_context>
chip_gen: v7x
topology: tpu7x:2x2x1
jax: 0.10.0
libtpu: 0.0.40
codegen_flags: <defaults>
</compile_context>

<pallas_src>
import numpy as np
import jax
import jax.numpy as jnp
from jax.experimental import pallas as pl
from jax.experimental.pallas import tpu as pltpu

LANE = 128
SUBLANE = 8


def _round_up(v, m):
    return ((v + m - 1) // m) * m


# ----------------------------------------------------------------------------
# Kernels
# ----------------------------------------------------------------------------
def _single_block_kernel(x_ref, w_ref, b_ref, o_ref):
    # Whole spatial extent in one block: spatial sum -> matmul -> sigmoid.
    s = jnp.sum(x_ref[...].astype(jnp.float32), axis=-1)               # (B_TILE, C_in)
    z = jnp.dot(s, w_ref[...], preferred_element_type=jnp.float32)     # (B_TILE, C_out_pad)
    o_ref[...] = jax.nn.sigmoid(z + b_ref[...]).astype(o_ref.dtype)


def _make_streaming_kernel(hw_tile, rem):
    """Multi-step HW reduction. hw_tile % 128 == 0, rem = HW % hw_tile (0 => no tail)."""
    n_groups = hw_tile // LANE

    def _accumulate(x_ref, acc_ref, masked):
        partial = None
        for j in range(n_groups):
            lo = j * LANE
            if masked and lo >= rem:
                break                                    # lane-group fully out of range
            blk = x_ref[:, :, pl.ds(lo, LANE)].astype(jnp.float32)
            if masked and lo + LANE > rem:               # straddles the valid boundary
                lane = jax.lax.broadcasted_iota(jnp.int32, blk.shape, 2)
                blk = jnp.where(lane < (rem - lo), blk, 0.0)
            partial = blk if partial is None else partial + blk
        acc_ref[...] += partial

    def kernel(x_ref, w_ref, b_ref, o_ref, acc_ref):
        k = pl.program_id(1)
        nk = pl.num_programs(1)

        @pl.when(k == 0)
        def _():
            acc_ref[...] = jnp.zeros_like(acc_ref)

        if rem == 0:
            _accumulate(x_ref, acc_ref, masked=False)
        else:
            @pl.when(k < nk - 1)
            def _():
                _accumulate(x_ref, acc_ref, masked=False)

            @pl.when(k == nk - 1)
            def _():
                _accumulate(x_ref, acc_ref, masked=True)

        @pl.when(k == nk - 1)
        def _():
            s = jnp.sum(acc_ref[...], axis=-1)            # single cross-lane reduce
            z = jnp.dot(s, w_ref[...], preferred_element_type=jnp.float32)
            o_ref[...] = jax.nn.sigmoid(z + b_ref[...]).astype(o_ref.dtype)

    return kernel


# ----------------------------------------------------------------------------
# Wrapper
# ----------------------------------------------------------------------------
def shuffle_attn(x, weight, bias, group, *, max_hw_tile=None,
                 vmem_limit_bytes=48 * 1024 * 1024):
    """x: (B, C_in, H, W), weight: (C_out, C_in//group, 1, 1), bias: (C_out,)."""
    B, C_in, H, W = x.shape
    C_out = weight.shape[0]
    assert C_in % group == 0 and C_out % group == 0
    cig, cog = C_in // group, C_out // group
    HW = H * W
    itemsize = jnp.dtype(x.dtype).itemsize

    # --- parameter glue (plain JAX, one-time): fold grouped conv + channel perms ---
    w2 = weight.reshape(C_out, cig).astype(jnp.float32)
    w_dense = jnp.zeros((C_out, C_in), dtype=jnp.float32)
    for g in range(group):
        w_dense = w_dense.at[g * cog:(g + 1) * cog,
                             g * cig:(g + 1) * cig].set(w2[g * cog:(g + 1) * cog])

    # channel_shuffle: shuffled channel (g*cig + gc) reads original channel (gc*group + g)
    perm_in = np.array([gc * group + g for g in range(group) for gc in range(cig)])
    w_eff = jnp.zeros_like(w_dense).at[:, perm_in].set(w_dense)

    # channel_rearrange: final channel (gc*group + g) takes conv output channel (g*cog + gc)
    perm_out = np.array([g * cog + gc for gc in range(cog) for g in range(group)])
    w_final = w_eff[perm_out]
    b_final = bias[perm_out].astype(jnp.float32)

    # Fold the 1/(H*W) mean scale; transpose to (C_in, C_out).
    wT = w_final.T * (1.0 / float(HW))

    # Pad C_out to full lane width for unmasked, lane-dense output stores.
    C_out_pad = _round_up(max(C_out, LANE), LANE)
    if C_out_pad != C_out:
        wT = jnp.pad(wT, ((0, 0), (0, C_out_pad - C_out)))
        b_final = jnp.pad(b_final, (0, C_out_pad - C_out))
    b2 = b_final.reshape(1, C_out_pad)

    # --- tiling ------------------------------------------------------------------
    if B <= SUBLANE:
        B_TILE = B                                       # block == full batch dim
    else:
        # multiple of 8, <= B, up to 64; keep >= 2 batch blocks for megacore if possible
        cap = B if B < 2 * SUBLANE else B // 2
        B_TILE = max(SUBLANE, min(64, (cap // SUBLANE) * SUBLANE))
        # keep the lane-wide accumulator scratch modest
        while B_TILE > SUBLANE and B_TILE * C_in * LANE * 4 > (8 << 20):
            B_TILE = max(SUBLANE, (B_TILE // 2 // SUBLANE) * SUBLANE)
    grid_b = pl.cdiv(B, B_TILE)
    B_out = grid_b * B_TILE                              # only the output array is padded

    # VMEM budget for the double-buffered x block (dtype-aware).
    fixed = (2 * C_in * C_out_pad * 4                    # resident weight (double-buffered)
             + 2 * C_out_pad * 4                         # bias
             + 2 * B_TILE * C_out_pad * itemsize         # output blocks
             + B_TILE * C_in * LANE * 4                  # accumulator scratch
             + (2 << 20))                                # compiler-internal headroom
    per_buf = max(vmem_limit_bytes - fixed, 2 * B_TILE * C_in * LANE * itemsize) // 2
    max_hw = max(LANE, (per_buf // (B_TILE * C_in * itemsize)) // LANE * LANE)
    if max_hw_tile is not None:
        max_hw = min(max_hw, max(LANE, (max_hw_tile // LANE) * LANE))

    x_flat = x.reshape(B, C_in, HW)                      # no HBM padding of x

    if HW <= max_hw:
        # Whole spatial extent fits in one block: single-step kernel, no scratch.
        grid = (grid_b,)
        kernel = _single_block_kernel
        in_specs = [
            pl.BlockSpec((B_TILE, C_in, HW), lambda b: (b, 0, 0)),
            pl.BlockSpec((C_in, C_out_pad), lambda b: (0, 0)),   # resident weight
            pl.BlockSpec((1, C_out_pad), lambda b: (0, 0)),      # resident bias
        ]
        out_spec = pl.BlockSpec((B_TILE, C_out_pad), lambda b: (b, 0))
        scratch_shapes = []
        dim_sem = ("parallel",)
    else:
        # Balanced spatial tiles (wasted tail < 128 columns), multiple of 128 lanes.
        nk0 = pl.cdiv(HW, max_hw)
        HW_TILE = _round_up(pl.cdiv(HW, nk0), LANE)
        nk = pl.cdiv(HW, HW_TILE)
        rem = HW % HW_TILE                               # masked in-kernel on last step
        grid = (grid_b, nk)
        kernel = _make_streaming_kernel(HW_TILE, rem)
        in_specs = [
            pl.BlockSpec((B_TILE, C_in, HW_TILE), lambda b, k: (b, 0, k)),
            pl.BlockSpec((C_in, C_out_pad), lambda b, k: (0, 0)),
            pl.BlockSpec((1, C_out_pad), lambda b, k: (0, 0)),
        ]
        out_spec = pl.BlockSpec((B_TILE, C_out_pad), lambda b, k: (b, 0))
        scratch_shapes = [pltpu.VMEM((B_TILE, C_in, LANE), jnp.float32)]
        dim_sem = ("parallel", "arbitrary")

    cost = pl.CostEstimate(
        flops=int(B * C_in * HW + 2 * B * C_in * C_out),
        transcendentals=int(B * C_out),
        bytes_accessed=int(B * C_in * HW * itemsize
                           + C_in * C_out_pad * 4
                           + B_out * C_out_pad * itemsize),
    )

    out = pl.pallas_call(
        kernel,
        out_shape=jax.ShapeDtypeStruct((B_out, C_out_pad), x.dtype),
        grid=grid,
        in_specs=in_specs,
        out_specs=out_spec,
        scratch_shapes=scratch_shapes,
        compiler_params=pltpu.CompilerParams(
            dimension_semantics=dim_sem,
            vmem_limit_bytes=vmem_limit_bytes),
        cost_estimate=cost,
    )(x_flat, wT, b2)

    return out[:B, :C_out].reshape(B, C_out, 1, 1)


# ----------------------------------------------------------------------------
# Pure-JAX reference (mirrors the PyTorch forward)
# ----------------------------------------------------------------------------
def _reference(x, weight, bias, group):
    B, C, H, W = x.shape
    cig = C // group
    xs = x.reshape(B, cig, group, H, W).transpose(0, 2, 1, 3, 4).reshape(B, C, H, W)
    pooled = xs.mean(axis=(2, 3))                                   # (B, C)
    C_out = weight.shape[0]
    cog = C_out // group
    w2 = weight.reshape(C_out, cig)
    out = jnp.zeros((B, C_out), dtype=x.dtype)
    for g in range(group):
        out = out.at[:, g * cog:(g + 1) * cog].set(
            pooled[:, g * cig:(g + 1) * cig] @ w2[g * cog:(g + 1) * cog].T)
    out = jax.nn.sigmoid(out + bias[None, :])
    out = out.reshape(B, group, cog, 1, 1).transpose(0, 2, 1, 3, 4).reshape(B, C_out, 1, 1)
    return out


if __name__ == "__main__":
    key = jax.random.PRNGKey(0)

    # --- Test 1: module-sized small shapes (single-step spatial path) ----------
    B, C_in, C_out, H, W, group = 2, 8, 8, 16, 16, 4
    k1, k2, k3, key = jax.random.split(key, 4)
    x = jax.random.normal(k1, (B, C_in, H, W), dtype=jnp.float32)
    weight = jax.random.normal(k2, (C_out, C_in // group, 1, 1), dtype=jnp.float32) * 0.1
    bias = jax.random.normal(k3, (C_out,), dtype=jnp.float32) * 0.1

    y = jax.block_until_ready(shuffle_attn(x, weight, bias, group))
    y_ref = jax.block_until_ready(_reference(x, weight, bias, group))
    assert y.shape == (B, C_out, 1, 1)
    np.testing.assert_allclose(np.asarray(y), np.asarray(y_ref), rtol=1e-5, atol=1e-5)

    # --- Test 2: streaming path (HW tail mask + partial batch tile, no x pad) --
    B, C_in, C_out, H, W, group = 10, 16, 16, 18, 18, 4
    k1, k2, k3, key = jax.random.split(key, 4)
    x = jax.random.normal(k1, (B, C_in, H, W), dtype=jnp.float32)
    weight = jax.random.normal(k2, (C_out, C_in // group, 1, 1), dtype=jnp.float32) * 0.1
    bias = jax.random.normal(k3, (C_out,), dtype=jnp.float32) * 0.1

    y = jax.block_until_ready(shuffle_attn(x, weight, bias, group, max_hw_tile=128))
    y_ref = jax.block_until_ready(_reference(x, weight, bias, group))
    np.testing.assert_allclose(np.asarray(y), np.asarray(y_ref), rtol=1e-5, atol=1e-5)

    print("KERNEL_OK")
</pallas_src>

<mosaic_0001>
module attributes {stable_mosaic.version = 11 : i64} {
  func.func @_single_block_kernel(%arg0: i32, %arg1: memref<2x8x256xf32, #tpu.memory_space<vmem>>, %arg2: memref<8x128xf32, #tpu.memory_space<vmem>>, %arg3: memref<1x128xf32, #tpu.memory_space<vmem>>, %arg4: memref<2x128xf32, #tpu.memory_space<vmem>>) attributes {dimension_semantics = [#tpu.dimension_semantics<parallel>], iteration_bounds = array<i64: 1>, scalar_prefetch = 0 : i64, scratch_operands = 0 : i64, tpu.core_type = #tpu.core_type<tc>, window_params = [{transform_indices = @transform_0, window_bounds = array<i64: 2, 8, 256>}, {pipeline_mode = #tpu.pipeline_mode<synchronous>, transform_indices = @transform_1, window_bounds = array<i64: 8, 128>}, {pipeline_mode = #tpu.pipeline_mode<synchronous>, transform_indices = @transform_2, window_bounds = array<i64: 1, 128>}, {transform_indices = @transform_3, window_bounds = array<i64: 2, 128>}]} {
    %c0 = arith.constant 0 : index
    %c0_0 = arith.constant 0 : index
    %c0_1 = arith.constant 0 : index
    %0 = vector.load %arg1[%c0, %c0_0, %c0_1] : memref<2x8x256xf32, #tpu.memory_space<vmem>>, vector<2x8x256xf32>
    %cst = arith.constant dense<0.000000e+00> : vector<2x8xf32>
    %1 = vector.multi_reduction <add>, %0, %cst [2] : vector<2x8x256xf32> to vector<2x8xf32>
    %c0_2 = arith.constant 0 : index
    %c0_3 = arith.constant 0 : index
    %2 = vector.load %arg2[%c0_2, %c0_3] : memref<8x128xf32, #tpu.memory_space<vmem>>, vector<8x128xf32>
    %cst_4 = arith.constant dense<0.000000e+00> : vector<2x128xf32>
    %3 = tpu.matmul %1, %2, %cst_4 {dimension_numbers = #tpu.dot_dimension_numbers<[1], [0], [0], [1], [0, 0, 1, 1], [], []>} : vector<2x8xf32>, vector<8x128xf32>, vector<2x128xf32> -> vector<2x128xf32>
    %c0_5 = arith.constant 0 : index
    %c0_6 = arith.constant 0 : index
    %4 = vector.load %arg3[%c0_5, %c0_6] : memref<1x128xf32, #tpu.memory_space<vmem>>, vector<1x128xf32>
    %5 = vector.broadcast %4 : vector<1x128xf32> to vector<2x128xf32>
    %6 = arith.addf %3, %5 : vector<2x128xf32>
    %7 = arith.negf %6 : vector<2x128xf32>
    %8 = math.exp %7 : vector<2x128xf32>
    %cst_7 = arith.constant 1.000000e+00 : f32
    %9 = vector.broadcast %cst_7 : f32 to vector<2x128xf32>
    %10 = arith.addf %9, %8 : vector<2x128xf32>
    %11 = arith.divf %9, %10 : vector<2x128xf32>
    %c0_8 = arith.constant 0 : index
    %c0_9 = arith.constant 0 : index
    %12 = vector.load %arg4[%c0_8, %c0_9] : memref<2x128xf32, #tpu.memory_space<vmem>>, vector<2x128xf32>
    tpu.vector_store %arg4[%c0_8, %c0_9], %11 {strides = array<i32>} : memref<2x128xf32, #tpu.memory_space<vmem>>, vector<2x128xf32>,
    return
  }
  func.func @transform_0(%arg0: i32) -> (i32, i32, i32) {
    %c0_i32 = arith.constant 0 : i32
    %c0_i32_0 = arith.constant 0 : i32
    %c0_i32_1 = arith.constant 0 : i32
    return %arg0, %c0_i32, %c0_i32_0 : i32, i32, i32
  }
  func.func @transform_1(%arg0: i32) -> (i32, i32) {
    %c0_i32 = arith.constant 0 : i32
    %c0_i32_0 = arith.constant 0 : i32
    %c0_i32_1 = arith.constant 0 : i32
    return %c0_i32, %c0_i32_0 : i32, i32
  }
  func.func @transform_2(%arg0: i32) -> (i32, i32) {
    %c0_i32 = arith.constant 0 : i32
    %c0_i32_0 = arith.constant 0 : i32
    %c0_i32_1 = arith.constant 0 : i32
    return %c0_i32, %c0_i32_0 : i32, i32
  }
  func.func @transform_3(%arg0: i32) -> (i32, i32) {
    %c0_i32 = arith.constant 0 : i32
    %c0_i32_0 = arith.constant 0 : i32
    return %arg0, %c0_i32 : i32, i32
  }
}

</mosaic_0001>

<llo_original>
// kernel: tpu_custom_call.1
$region0: #{tpu_custom_call.1}
  #allocation0 [shape = 'u32[]', space=smem, size = 0x4, offset = 0x4, fixed_abs, tag = 'smem constant byte address 0x4 - core index']
  #allocation1 [shape = 'u32[144,128]{1,0:T(1,128)}', space=vmem, size = 0x12000, scoped, tag = 'internal scratch']
  %s0 = inlined_call_operand.hbm [shape: f32[2,8,256], index: 0, kind: input, shape index: {}]
  %s1 = inlined_call_operand.hbm [shape: f32[8,128], index: 1, kind: input, shape index: {}]
  %s2 = inlined_call_operand.vmem [shape: f32[1,128], index: 2, kind: input, shape index: {}]
  %s3 = inlined_call_operand.hbm [shape: f32[2,128], index: 3, kind: output, shape index: {}]
  %s4 = sld [smem:[#allocation0]]
  $region30: #{tpu_custom_call.1} parent=0
    _
  %s6 = ssub.s32 1, %s4
  %s7 = scalar_select 0, %s6, %s4
  $region1: #{tpu_custom_call.1} parent=0
    #allocation2 [shape = 'u8[16384]{0}', space=vmem, size = 0x4000, scoped, tag = 'input window, operand 0, single buffered']
    #allocation3 [shape = 's32[1]{0}', space=sflag, size = 0x4, scoped, tag = 'scoped memory for tpu_custom_call.1']
    #allocation4 [shape = 's32[1]{0}', space=sflag, size = 0x4, scoped, tag = 'scoped memory for tpu_custom_call.1']
    #allocation5 [shape = 'u8[4096]{0}', space=vmem, size = 0x1000, scoped, tag = 'input window, operand 1, single buffered']
    #allocation6 [shape = 's32[1]{0}', space=sflag, size = 0x4, scoped, tag = 'scoped memory for tpu_custom_call.1']
    #allocation7 [shape = 'u8[1024]{0}', space=vmem, size = 0x400, scoped, tag = 'output window, operand 0, single buffered']
    %8 = vsyncpa [#allocation3], 0
    %9 = vsyncpa [#allocation6], 0
    %10 = vsyncpa [#allocation4], 0
    // Predicated region
    $region2: #{tpu_custom_call.1} parent=1 // pred_check
      _
    $region3: #{tpu_custom_call.1} parent=1 // pred_check_branch
      %12 = sbr.rel (0) target = $region5
    $region4: #{tpu_custom_call.1} parent=1 // pred_region
      %s14 = ssub.s32 512, 512
      %15 = vsyncadd [#allocation3], %s14
      %s16 = sshll.u32 [#allocation2], 4
      %s17 = int_to_ptr.vmem [resolvable:$true] %s16
      %22 = dma.hbm_to_vmem [thread:$0]  %s0, 512, %s17, [#allocation3], 256, 256, 16
    $region5: #{tpu_custom_call.1} parent=1 // pred_fallthru
      _
    // Predicated region
    $region6: #{tpu_custom_call.1} parent=1 // pred_check
      _
    $region7: #{tpu_custom_call.1} parent=1 // pred_check_branch
      %24 = sbr.rel (0) target = $region9
    $region8: #{tpu_custom_call.1} parent=1 // pred_region
      %s26 = ssub.s32 128, 128
      %27 = vsyncadd [#allocation6], %s26
      %s29 = sshll.u32 [#allocation5], 4
      %s30 = int_to_ptr.vmem [resolvable:$true] %s29
      %32 = dma.hbm_to_vmem [thread:$0]  %s1, 128, %s30, [#allocation6]
    $region9: #{tpu_custom_call.1} parent=1 // pred_fallthru
      _
    // Predicated region
    $region10: #{tpu_custom_call.1} parent=1 // pred_check
      _
    $region11: #{tpu_custom_call.1} parent=1 // pred_check_branch
      %34 = sbr.rel (0) target = $region13
    $region12: #{tpu_custom_call.1} parent=1 // pred_region
      _
    $region13: #{tpu_custom_call.1} parent=1 // pred_fallthru
      _
    // Predicated region
    $region14: #{tpu_custom_call.1} parent=1 // pred_check
      _
    $region15: #{tpu_custom_call.1} parent=1 // pred_check_branch
      %36 = sbr.rel (0) target = $region17
    $region16: #{tpu_custom_call.1} parent=1 // pred_region
      %37 = dma.done [#allocation3], 512
    $region17: #{tpu_custom_call.1} parent=1 // pred_fallthru
      _
    // Predicated region
    $region18: #{tpu_custom_call.1} parent=1 // pred_check
      _
    $region19: #{tpu_custom_call.1} parent=1 // pred_check_branch
      %39 = sbr.rel (0) target = $region21
    $region20: #{tpu_custom_call.1} parent=1 // pred_region
      %40 = dma.done [#allocation6], 128
    $region21: #{tpu_custom_call.1} parent=1 // pred_fallthru
      _
    %v41 = vld [vmem:[#allocation2] sm:$0xff]
    %v42 = vld [vmem:[#allocation2 + $0x8] sm:$0xff]
    %v43 = vld [vmem:[#allocation2 + $0x10] sm:$0xff]
    %v44 = vld [vmem:[#allocation2 + $0x18] sm:$0xff]
    %v45 = vadd.f32 %v41, %v42
    %46 = vadd.xlane.f32.xlu0 %v45
    %v47 = vpop.xlane.xlu0 %46
    %v48 = vadd.f32 %v43, %v44
    %49 = vadd.xlane.f32.xlu0 %v48
    %v50 = vpop.xlane.xlu0 %49
    %v51 = vld [vmem:[#allocation5] sm:$0xff]
    %v52 = vld [vmem:[%s2] sm:$0x1]
    %v54 = vlaneseq
    %v55 = vshrl.u32 %v54, 7
    %v56 = vsub.s32 0, %v55
    %v57 = vrot.slane %v52, %v56
    %v61 = vlaneseq
    %v62 = vand.u32 %v61, 127
    %v63 = vlaneseq
    %v64 = vshrl.u32 %v63, 7
    %v65 = vsub.s32 %v62, %v64
    %v66 = vrot.slane %v47, %v65
    %v67 = vlaneseq
    %v68 = vshrl.u32 %v67, 7
    %v69 = vsub.s32 %v62, %v68
    %v70 = vrot.slane %v50, %v69
    %vm71 = vcmask 1041409
    %v72 = vsel %vm71, %v70, %v66
    %vm73 = vcmask 64512
    %v74 = vsel %vm73, %v72, 0
    %76 = vmatprep.subr.mxu0 0.0
    %77 = vmatpush1.msra.mxu0 %v51
    %78 = vmatprep.subr.mxu0 0.0
    %79 = vmatpush1.msra.mxu0 0.0
    %80 = vmatprep.subr.mxu0 0.0
    %81 = vmatpush1.msra.mxu0 0.0
    %82 = vmatprep.subr.mxu0 0.0
    %83 = vmatpush1.msra.mxu0 0.0
    %84 = vmatprep.subr.mxu0 0.0
    %85 = vmatpush1.msra.mxu0 0.0
    %86 = vmatprep.subr.mxu0 0.0
    %87 = vmatpush1.msra.mxu0 0.0
    %88 = vmatprep.subr.mxu0 0.0
    %89 = vmatpush1.msra.mxu0 0.0
    %90 = vmatprep.subr.mxu0 0.0
    %91 = vmatpush1.msra.mxu0 0.0
    %92 = vmatprep.subr.mxu0 0.0
    %93 = vmatpush1.msra.mxu0 0.0
    %94 = vmatprep.subr.mxu0 0.0
    %95 = vmatpush1.msra.mxu0 0.0
    %96 = vmatprep.subr.mxu0 0.0
    %97 = vmatpush1.msra.mxu0 0.0
    %98 = vmatprep.subr.mxu0 0.0
    %99 = vmatpush1.msra.mxu0 0.0
    %100 = vmatprep.subr.mxu0 0.0
    %101 = vmatpush1.msra.mxu0 0.0
    %102 = vmatprep.subr.mxu0 0.0
    %103 = vmatpush1.msra.mxu0 0.0
    %104 = vmatprep.subr.mxu0 0.0
    %105 = vmatpush1.msra.mxu0 0.0
    %106 = vmatprep.subr.mxu0 0.0
    %107 = vmatpush1.msra.mxu0 0.0
    %108 = vmatprep.subr.mxu0 0.0
    %109 = vmatpush1.msra.mxu0 0.0
    %110 = vmatprep.subr.mxu0 0.0
    %111 = vmatpush1.msra.mxu0 0.0
    %112 = vmatprep.subr.mxu0 0.0
    %113 = vmatpush1.msra.mxu0 0.0
    %114 = vmatprep.subr.mxu0 0.0
    %115 = vmatpush1.msra.mxu0 0.0
    %116 = vmatprep.subr.mxu0 0.0
    %117 = vmatpush1.msra.mxu0 0.0
    %118 = vmatprep.subr.mxu0 0.0
    %119 = vmatpush1.msra.mxu0 0.0
    %120 = vmatprep.subr.mxu0 0.0
    %121 = vmatpush1.msra.mxu0 0.0
    %122 = vmatprep.subr.mxu0 0.0
    %123 = vmatpush1.msra.mxu0 0.0
    %124 = vmatprep.subr.mxu0 0.0
    %125 = vmatpush1.msra.mxu0 0.0
    %126 = vmatprep.subr.mxu0 0.0
    %127 = vmatpush1.msra.mxu0 0.0
    %128 = vmatprep.subr.mxu0 0.0
    %129 = vmatpush1.msra.mxu0 0.0
    %130 = vmatprep.subr.mxu0 0.0
    %131 = vmatpush1.msra.mxu0 0.0
    %132 = vmatprep.subr.mxu0 0.0
    %133 = vmatpush1.msra.mxu0 0.0
    %134 = vmatprep.subr.mxu0 0.0
    %135 = vmatpush1.msra.mxu0 0.0
    %136 = vmatprep.subr.mxu0 0.0
    %137 = vmatpush1.msra.mxu0 0.0
    %138 = vmatprep.subr.mxu0 0.0
    %139 = vmatpush1.msra.mxu0 0.0
    %140 = vmatprep.mubr.f32.mxu0 0.0
    %141 = vmatmul.mubr.f32.gmra.mrb[0].mxu0 %v74
    %v142 = vpop.f32.mrb[0].mxu0
    %v143 = vadd.f32 %v57, %v142
    %v144 = vpop.f32.mrb[0].mxu0
    %145 = vdwg.mxu0
    %v146 = vxor.u32 %v143, 2147483648
    %v147 = vmul.f32 %v146, 1.442695
    %v148 = vpow.pop %v147
    %v149 = vadd.f32 %v148, 1.0
    %v150 = vrcp.pop %v149
    %v151 = vmul.f32 1.0, %v150
    %152 = vst [vmem:[#allocation7] sm:$0x3] %v151
    // Predicated region
    $region22: #{tpu_custom_call.1} parent=1 // pred_check
      _
    $region23: #{tpu_custom_call.1} parent=1 // pred_check_branch
      %154 = sbr.rel (0) target = $region25
    $region24: #{tpu_custom_call.1} parent=1 // pred_region
      %s156 = ssub.s32 32, 32
      %157 = vsyncadd [#allocation4], %s156
      %s159 = sshll.u32 [#allocation7], 4
      %s160 = int_to_ptr.vmem [resolvable:$true] %s159
      %162 = dma.vmem_to_hbm [thread:$0]  %s160, 32, %s3, [#allocation4]
    $region25: #{tpu_custom_call.1} parent=1 // pred_fallthru
      _
    // Predicated region
    $region26: #{tpu_custom_call.1} parent=1 // pred_check
      _
    $region27: #{tpu_custom_call.1} parent=1 // pred_check_branch
      %164 = sbr.rel (0) target = $region29
    $region28: #{tpu_custom_call.1} parent=1 // pred_region
      %165 = dma.done [#allocation4], 32
    $region29: #{tpu_custom_call.1} parent=1 // pred_fallthru
      _
    %166 = vsyncpa [#allocation3], 1
    %167 = vsyncpa [#allocation6], 1
    %168 = vsyncpa [#allocation4], 1

</llo_original>
